<compile_context>
chip_gen: v5e
topology: v5e:2x2
jax: 0.10.0
libtpu: 0.0.40
codegen_flags: <defaults>
</compile_context>

<pallas_src>
import functools

import jax
import jax.numpy as jnp
from jax import lax
from jax.experimental import pallas as pl
from jax.experimental.pallas import tpu as pltpu


def _basic_block_kernel(x_ref, rc_ref, w1_ref, s1_ref, b1_ref,
                        w2_ref, s2_ref, b2_ref, out_ref, *, H, W):
    """One batch element per grid step.

    x_ref  : (1, C, H*W)   input, channels on sublanes, H*W lane-dense
    rc_ref : (2, H*W)      int32 [row_idx; col_idx] of every flat position
    w1_ref : (C, 9*C)      conv1 weights, columns = (tap-major, channel)
    s1/b1  : (C, 1)        folded BN1 scale / bias
    w2_ref : (C, 9*C)      conv2 weights
    s2/b2  : (C, 1)        folded BN2 scale / bias
    out_ref: (1, C, H*W)
    """
    C = x_ref.shape[1]
    HW = H * W

    x = x_ref[0]                                            # (C, HW) f32

    # Per-position row/col indices broadcast once to (C, HW) (sublane bcast).
    row = jnp.broadcast_to(rc_ref[0:1, :], (C, HW))
    col = jnp.broadcast_to(rc_ref[1:2, :], (C, HW))

    # 9 taps: flat lane shift + border-validity mask (shared by both convs).
    shifts, masks = [], []
    for dy in (-1, 0, 1):
        for dx in (-1, 0, 1):
            shifts.append(dy * W + dx)
            masks.append((row + dy >= 0) & (row + dy < H) &
                         (col + dx >= 0) & (col + dx < W))

    def conv3x3_bn(inp, w, scale, bias):
        # im2col along the channel (sublane) axis -> one K = 9*C MXU matmul.
        taps = []
        for s, m in zip(shifts, masks):
            # shifted[p] = inp[p + s]  (wrap-around is masked off below)
            shifted = inp if s == 0 else pltpu.roll(inp, (-s) % HW, axis=1)
            taps.append(jnp.where(m, shifted, 0.0))
        patch = jnp.concatenate(taps, axis=0)                # (9*C, HW)
        acc = jnp.dot(w, patch, preferred_element_type=jnp.float32)  # (C, HW)
        return acc * scale + bias                            # folded BN

    # conv1 -> bn1 -> relu
    h = jnp.maximum(conv3x3_bn(x, w1_ref[...], s1_ref[...], b1_ref[...]), 0.0)
    # conv2 -> bn2 -> +identity -> relu
    o = conv3x3_bn(h, w2_ref[...], s2_ref[...], b2_ref[...])
    out_ref[0] = jnp.maximum(o + x, 0.0)


def basic_block(x_nchw, w1, bn1, w2, bn2, eps=1e-5):
    """BasicBlock forward (stride=1, downsample=None). x_nchw: (N, C, H, W)."""
    N, Cin, H, W = x_nchw.shape
    Cout = w1.shape[0]
    assert Cin == Cout, "downsample=None / stride=1 requires Cin == Cout"
    assert w1.shape[2:] == (3, 3) and w2.shape[2:] == (3, 3)
    HW = H * W

    # NCHW -> (N, C, H*W): free reshape (no transpose, no padding, no copy).
    x = x_nchw.astype(jnp.float32).reshape(N, Cin, HW)

    # Flat row/col index of every spatial position (for in-kernel border masks).
    hw = jnp.arange(HW, dtype=jnp.int32)
    rc = jnp.stack([hw // W, hw % W], axis=0)                # (2, HW)

    # Conv weights (Cout, Cin, 3, 3) -> (Cout, 9*Cin), tap-major columns:
    # column index (ky*3+kx)*Cin + ci  <->  w[co, ci, ky, kx]
    w1r = jnp.transpose(w1, (0, 2, 3, 1)).reshape(Cout, 9 * Cin).astype(jnp.float32)
    w2r = jnp.transpose(w2, (0, 2, 3, 1)).reshape(Cout, 9 * Cout).astype(jnp.float32)

    # Fold eval-mode BatchNorm into per-channel scale/bias, shaped (C, 1) so it
    # lane-broadcasts over H*W inside the kernel.
    def fold(bn):
        g, b, m, v = bn
        s = g / jnp.sqrt(v + eps)
        return (s.reshape(-1, 1).astype(jnp.float32),
                (b - m * s).reshape(-1, 1).astype(jnp.float32))

    s1, b1 = fold(bn1)
    s2, b2 = fold(bn2)

    kernel = functools.partial(_basic_block_kernel, H=H, W=W)

    out = pl.pallas_call(
        kernel,
        grid=(N,),
        in_specs=[
            pl.BlockSpec((1, Cin, HW), lambda n: (n, 0, 0)),    # x
            pl.BlockSpec((2, HW), lambda n: (0, 0)),            # rc
            pl.BlockSpec((Cout, 9 * Cin), lambda n: (0, 0)),    # w1
            pl.BlockSpec((Cout, 1), lambda n: (0, 0)),          # s1
            pl.BlockSpec((Cout, 1), lambda n: (0, 0)),          # b1
            pl.BlockSpec((Cout, 9 * Cout), lambda n: (0, 0)),   # w2
            pl.BlockSpec((Cout, 1), lambda n: (0, 0)),          # s2
            pl.BlockSpec((Cout, 1), lambda n: (0, 0)),          # b2
        ],
        out_specs=pl.BlockSpec((1, Cout, HW), lambda n: (n, 0, 0)),
        out_shape=jax.ShapeDtypeStruct((N, Cout, HW), jnp.float32),
        compiler_params=pltpu.CompilerParams(
            dimension_semantics=("parallel",)),
    )(x, rc, w1r, s1, b1, w2r, s2, b2)

    return out.reshape(N, Cout, H, W)


def basic_block_ref(x, w1, bn1, w2, bn2, eps=1e-5):
    """Pure-JAX reference (matches PyTorch eval-mode semantics)."""
    def conv(x, w):
        return lax.conv_general_dilated(
            x, w, window_strides=(1, 1), padding=((1, 1), (1, 1)),
            dimension_numbers=("NCHW", "OIHW", "NCHW"))

    def bn(x, p):
        g, b, m, v = p
        inv = g / jnp.sqrt(v + eps)
        return x * inv[None, :, None, None] + (b - m * inv)[None, :, None, None]

    out = jax.nn.relu(bn(conv(x, w1), bn1))
    out = bn(conv(out, w2), bn2)
    return jax.nn.relu(out + x)


if __name__ == "__main__":
    key = jax.random.PRNGKey(0)
    N, C, H, W = 2, 8, 16, 16

    keys = jax.random.split(key, 7)
    x = jax.random.normal(keys[0], (N, C, H, W), jnp.float32)
    w1 = jax.random.normal(keys[1], (C, C, 3, 3), jnp.float32) * 0.1
    w2 = jax.random.normal(keys[2], (C, C, 3, 3), jnp.float32) * 0.1
    bn1 = (jax.random.uniform(keys[3], (C,), jnp.float32, 0.5, 1.5),   # gamma
           jax.random.normal(keys[4], (C,), jnp.float32) * 0.1,        # beta
           jax.random.normal(keys[5], (C,), jnp.float32) * 0.1,        # running_mean
           jax.random.uniform(keys[6], (C,), jnp.float32, 0.5, 1.5))   # running_var
    bn2 = (jnp.full((C,), 1.1, jnp.float32),
           jnp.full((C,), 0.05, jnp.float32),
           jnp.zeros((C,), jnp.float32),
           jnp.full((C,), 0.9, jnp.float32))

    out = jax.block_until_ready(basic_block(x, w1, bn1, w2, bn2))
    ref = basic_block_ref(x, w1, bn1, w2, bn2)

    assert out.shape == (N, C, H, W)
    err = float(jnp.max(jnp.abs(out - ref)))
    assert err < 2e-4, f"max abs err {err}"
    print("KERNEL_OK")
</pallas_src>

<mosaic_0001>
module attributes {stable_mosaic.version = 11 : i64} {
  func.func @_basic_block_kernel(%arg0: i32, %arg1: memref<1x8x256xf32, #tpu.memory_space<vmem>>, %arg2: memref<2x256xi32, #tpu.memory_space<vmem>>, %arg3: memref<8x72xf32, #tpu.memory_space<vmem>>, %arg4: memref<8x1xf32, #tpu.memory_space<vmem>>, %arg5: memref<8x1xf32, #tpu.memory_space<vmem>>, %arg6: memref<8x72xf32, #tpu.memory_space<vmem>>, %arg7: memref<8x1xf32, #tpu.memory_space<vmem>>, %arg8: memref<8x1xf32, #tpu.memory_space<vmem>>, %arg9: memref<1x8x256xf32, #tpu.memory_space<vmem>>) attributes {dimension_semantics = [#tpu.dimension_semantics<parallel>], iteration_bounds = array<i64: 2>, scalar_prefetch = 0 : i64, scratch_operands = 0 : i64, tpu.core_type = #tpu.core_type<tc>, window_params = [{transform_indices = @transform_0, window_bounds = array<i64: 1, 8, 256>}, {pipeline_mode = #tpu.pipeline_mode<synchronous>, transform_indices = @transform_1, window_bounds = array<i64: 2, 256>}, {pipeline_mode = #tpu.pipeline_mode<synchronous>, transform_indices = @transform_2, window_bounds = array<i64: 8, 72>}, {pipeline_mode = #tpu.pipeline_mode<synchronous>, transform_indices = @transform_3, window_bounds = array<i64: 8, 1>}, {pipeline_mode = #tpu.pipeline_mode<synchronous>, transform_indices = @transform_4, window_bounds = array<i64: 8, 1>}, {pipeline_mode = #tpu.pipeline_mode<synchronous>, transform_indices = @transform_5, window_bounds = array<i64: 8, 72>}, {pipeline_mode = #tpu.pipeline_mode<synchronous>, transform_indices = @transform_6, window_bounds = array<i64: 8, 1>}, {pipeline_mode = #tpu.pipeline_mode<synchronous>, transform_indices = @transform_7, window_bounds = array<i64: 8, 1>}, {transform_indices = @transform_8, window_bounds = array<i64: 1, 8, 256>}]} {
    %c0 = arith.constant 0 : index
    %c0_0 = arith.constant 0 : index
    %c0_1 = arith.constant 0 : index
    %0 = vector.load %arg1[%c0, %c0_0, %c0_1] : memref<1x8x256xf32, #tpu.memory_space<vmem>>, vector<1x8x256xf32>
    %1 = vector.shape_cast %0 : vector<1x8x256xf32> to vector<8x256xf32>
    %c0_2 = arith.constant 0 : index
    %c0_3 = arith.constant 0 : index
    %2 = vector.load %arg2[%c0_2, %c0_3] : memref<2x256xi32, #tpu.memory_space<vmem>>, vector<1x256xi32>
    %3 = vector.shape_cast %2 : vector<1x256xi32> to vector<1x256xi32>
    %4 = vector.broadcast %3 : vector<1x256xi32> to vector<8x256xi32>
    %c1 = arith.constant 1 : index
    %c0_4 = arith.constant 0 : index
    %5 = vector.load %arg2[%c1, %c0_4] : memref<2x256xi32, #tpu.memory_space<vmem>>, vector<1x256xi32>
    %6 = vector.shape_cast %5 : vector<1x256xi32> to vector<1x256xi32>
    %7 = vector.broadcast %6 : vector<1x256xi32> to vector<8x256xi32>
    %c-1_i32 = arith.constant -1 : i32
    %8 = vector.broadcast %c-1_i32 : i32 to vector<8x256xi32>
    %9 = arith.addi %4, %8 : vector<8x256xi32>
    %c0_i32 = arith.constant 0 : i32
    %10 = vector.broadcast %c0_i32 : i32 to vector<8x256xi32>
    %11 = arith.cmpi sge, %9, %10 : vector<8x256xi32>
    %c-1_i32_5 = arith.constant -1 : i32
    %12 = vector.broadcast %c-1_i32_5 : i32 to vector<8x256xi32>
    %13 = arith.addi %4, %12 : vector<8x256xi32>
    %c16_i32 = arith.constant 16 : i32
    %14 = vector.broadcast %c16_i32 : i32 to vector<8x256xi32>
    %15 = arith.cmpi slt, %13, %14 : vector<8x256xi32>
    %16 = arith.andi %11, %15 : vector<8x256xi1>
    %c-1_i32_6 = arith.constant -1 : i32
    %17 = vector.broadcast %c-1_i32_6 : i32 to vector<8x256xi32>
    %18 = arith.addi %7, %17 : vector<8x256xi32>
    %c0_i32_7 = arith.constant 0 : i32
    %19 = vector.broadcast %c0_i32_7 : i32 to vector<8x256xi32>
    %20 = arith.cmpi sge, %18, %19 : vector<8x256xi32>
    %21 = arith.andi %16, %20 : vector<8x256xi1>
    %c-1_i32_8 = arith.constant -1 : i32
    %22 = vector.broadcast %c-1_i32_8 : i32 to vector<8x256xi32>
    %23 = arith.addi %7, %22 : vector<8x256xi32>
    %c16_i32_9 = arith.constant 16 : i32
    %24 = vector.broadcast %c16_i32_9 : i32 to vector<8x256xi32>
    %25 = arith.cmpi slt, %23, %24 : vector<8x256xi32>
    %26 = arith.andi %21, %25 : vector<8x256xi1>
    %c-1_i32_10 = arith.constant -1 : i32
    %27 = vector.broadcast %c-1_i32_10 : i32 to vector<8x256xi32>
    %28 = arith.addi %4, %27 : vector<8x256xi32>
    %c0_i32_11 = arith.constant 0 : i32
    %29 = vector.broadcast %c0_i32_11 : i32 to vector<8x256xi32>
    %30 = arith.cmpi sge, %28, %29 : vector<8x256xi32>
    %c-1_i32_12 = arith.constant -1 : i32
    %31 = vector.broadcast %c-1_i32_12 : i32 to vector<8x256xi32>
    %32 = arith.addi %4, %31 : vector<8x256xi32>
    %c16_i32_13 = arith.constant 16 : i32
    %33 = vector.broadcast %c16_i32_13 : i32 to vector<8x256xi32>
    %34 = arith.cmpi slt, %32, %33 : vector<8x256xi32>
    %35 = arith.andi %30, %34 : vector<8x256xi1>
    %c0_i32_14 = arith.constant 0 : i32
    %36 = vector.broadcast %c0_i32_14 : i32 to vector<8x256xi32>
    %37 = arith.addi %7, %36 : vector<8x256xi32>
    %c0_i32_15 = arith.constant 0 : i32
    %38 = vector.broadcast %c0_i32_15 : i32 to vector<8x256xi32>
    %39 = arith.cmpi sge, %37, %38 : vector<8x256xi32>
    %40 = arith.andi %35, %39 : vector<8x256xi1>
    %c0_i32_16 = arith.constant 0 : i32
    %41 = vector.broadcast %c0_i32_16 : i32 to vector<8x256xi32>
    %42 = arith.addi %7, %41 : vector<8x256xi32>
    %c16_i32_17 = arith.constant 16 : i32
    %43 = vector.broadcast %c16_i32_17 : i32 to vector<8x256xi32>
    %44 = arith.cmpi slt, %42, %43 : vector<8x256xi32>
    %45 = arith.andi %40, %44 : vector<8x256xi1>
    %c-1_i32_18 = arith.constant -1 : i32
    %46 = vector.broadcast %c-1_i32_18 : i32 to vector<8x256xi32>
    %47 = arith.addi %4, %46 : vector<8x256xi32>
    %c0_i32_19 = arith.constant 0 : i32
    %48 = vector.broadcast %c0_i32_19 : i32 to vector<8x256xi32>
    %49 = arith.cmpi sge, %47, %48 : vector<8x256xi32>
    %c-1_i32_20 = arith.constant -1 : i32
    %50 = vector.broadcast %c-1_i32_20 : i32 to vector<8x256xi32>
    %51 = arith.addi %4, %50 : vector<8x256xi32>
    %c16_i32_21 = arith.constant 16 : i32
    %52 = vector.broadcast %c16_i32_21 : i32 to vector<8x256xi32>
    %53 = arith.cmpi slt, %51, %52 : vector<8x256xi32>
    %54 = arith.andi %49, %53 : vector<8x256xi1>
    %c1_i32 = arith.constant 1 : i32
    %55 = vector.broadcast %c1_i32 : i32 to vector<8x256xi32>
    %56 = arith.addi %7, %55 : vector<8x256xi32>
    %c0_i32_22 = arith.constant 0 : i32
    %57 = vector.broadcast %c0_i32_22 : i32 to vector<8x256xi32>
    %58 = arith.cmpi sge, %56, %57 : vector<8x256xi32>
    %59 = arith.andi %54, %58 : vector<8x256xi1>
    %c1_i32_23 = arith.constant 1 : i32
    %60 = vector.broadcast %c1_i32_23 : i32 to vector<8x256xi32>
    %61 = arith.addi %7, %60 : vector<8x256xi32>
    %c16_i32_24 = arith.constant 16 : i32
    %62 = vector.broadcast %c16_i32_24 : i32 to vector<8x256xi32>
    %63 = arith.cmpi slt, %61, %62 : vector<8x256xi32>
    %64 = arith.andi %59, %63 : vector<8x256xi1>
    %c0_i32_25 = arith.constant 0 : i32
    %65 = vector.broadcast %c0_i32_25 : i32 to vector<8x256xi32>
    %66 = arith.addi %4, %65 : vector<8x256xi32>
    %c0_i32_26 = arith.constant 0 : i32
    %67 = vector.broadcast %c0_i32_26 : i32 to vector<8x256xi32>
    %68 = arith.cmpi sge, %66, %67 : vector<8x256xi32>
    %c0_i32_27 = arith.constant 0 : i32
    %69 = vector.broadcast %c0_i32_27 : i32 to vector<8x256xi32>
    %70 = arith.addi %4, %69 : vector<8x256xi32>
    %c16_i32_28 = arith.constant 16 : i32
    %71 = vector.broadcast %c16_i32_28 : i32 to vector<8x256xi32>
    %72 = arith.cmpi slt, %70, %71 : vector<8x256xi32>
    %73 = arith.andi %68, %72 : vector<8x256xi1>
    %c-1_i32_29 = arith.constant -1 : i32
    %74 = vector.broadcast %c-1_i32_29 : i32 to vector<8x256xi32>
    %75 = arith.addi %7, %74 : vector<8x256xi32>
    %c0_i32_30 = arith.constant 0 : i32
    %76 = vector.broadcast %c0_i32_30 : i32 to vector<8x256xi32>
    %77 = arith.cmpi sge, %75, %76 : vector<8x256xi32>
    %78 = arith.andi %73, %77 : vector<8x256xi1>
    %c-1_i32_31 = arith.constant -1 : i32
    %79 = vector.broadcast %c-1_i32_31 : i32 to vector<8x256xi32>
    %80 = arith.addi %7, %79 : vector<8x256xi32>
    %c16_i32_32 = arith.constant 16 : i32
    %81 = vector.broadcast %c16_i32_32 : i32 to vector<8x256xi32>
    %82 = arith.cmpi slt, %80, %81 : vector<8x256xi32>
    %83 = arith.andi %78, %82 : vector<8x256xi1>
    %c0_i32_33 = arith.constant 0 : i32
    %84 = vector.broadcast %c0_i32_33 : i32 to vector<8x256xi32>
    %85 = arith.addi %4, %84 : vector<8x256xi32>
    %c0_i32_34 = arith.constant 0 : i32
    %86 = vector.broadcast %c0_i32_34 : i32 to vector<8x256xi32>
    %87 = arith.cmpi sge, %85, %86 : vector<8x256xi32>
    %c0_i32_35 = arith.constant 0 : i32
    %88 = vector.broadcast %c0_i32_35 : i32 to vector<8x256xi32>
    %89 = arith.addi %4, %88 : vector<8x256xi32>
    %c16_i32_36 = arith.constant 16 : i32
    %90 = vector.broadcast %c16_i32_36 : i32 to vector<8x256xi32>
    %91 = arith.cmpi slt, %89, %90 : vector<8x256xi32>
    %92 = arith.andi %87, %91 : vector<8x256xi1>
    %c0_i32_37 = arith.constant 0 : i32
    %93 = vector.broadcast %c0_i32_37 : i32 to vector<8x256xi32>
    %94 = arith.addi %7, %93 : vector<8x256xi32>
    %c0_i32_38 = arith.constant 0 : i32
    %95 = vector.broadcast %c0_i32_38 : i32 to vector<8x256xi32>
    %96 = arith.cmpi sge, %94, %95 : vector<8x256xi32>
    %97 = arith.andi %92, %96 : vector<8x256xi1>
    %c0_i32_39 = arith.constant 0 : i32
    %98 = vector.broadcast %c0_i32_39 : i32 to vector<8x256xi32>
    %99 = arith.addi %7, %98 : vector<8x256xi32>
    %c16_i32_40 = arith.constant 16 : i32
    %100 = vector.broadcast %c16_i32_40 : i32 to vector<8x256xi32>
    %101 = arith.cmpi slt, %99, %100 : vector<8x256xi32>
    %102 = arith.andi %97, %101 : vector<8x256xi1>
    %c0_i32_41 = arith.constant 0 : i32
    %103 = vector.broadcast %c0_i32_41 : i32 to vector<8x256xi32>
    %104 = arith.addi %4, %103 : vector<8x256xi32>
    %c0_i32_42 = arith.constant 0 : i32
    %105 = vector.broadcast %c0_i32_42 : i32 to vector<8x256xi32>
    %106 = arith.cmpi sge, %104, %105 : vector<8x256xi32>
    %c0_i32_43 = arith.constant 0 : i32
    %107 = vector.broadcast %c0_i32_43 : i32 to vector<8x256xi32>
    %108 = arith.addi %4, %107 : vector<8x256xi32>
    %c16_i32_44 = arith.constant 16 : i32
    %109 = vector.broadcast %c16_i32_44 : i32 to vector<8x256xi32>
    %110 = arith.cmpi slt, %108, %109 : vector<8x256xi32>
    %111 = arith.andi %106, %110 : vector<8x256xi1>
    %c1_i32_45 = arith.constant 1 : i32
    %112 = vector.broadcast %c1_i32_45 : i32 to vector<8x256xi32>
    %113 = arith.addi %7, %112 : vector<8x256xi32>
    %c0_i32_46 = arith.constant 0 : i32
    %114 = vector.broadcast %c0_i32_46 : i32 to vector<8x256xi32>
    %115 = arith.cmpi sge, %113, %114 : vector<8x256xi32>
    %116 = arith.andi %111, %115 : vector<8x256xi1>
    %c1_i32_47 = arith.constant 1 : i32
    %117 = vector.broadcast %c1_i32_47 : i32 to vector<8x256xi32>
    %118 = arith.addi %7, %117 : vector<8x256xi32>
    %c16_i32_48 = arith.constant 16 : i32
    %119 = vector.broadcast %c16_i32_48 : i32 to vector<8x256xi32>
    %120 = arith.cmpi slt, %118, %119 : vector<8x256xi32>
    %121 = arith.andi %116, %120 : vector<8x256xi1>
    %c1_i32_49 = arith.constant 1 : i32
    %122 = vector.broadcast %c1_i32_49 : i32 to vector<8x256xi32>
    %123 = arith.addi %4, %122 : vector<8x256xi32>
    %c0_i32_50 = arith.constant 0 : i32
    %124 = vector.broadcast %c0_i32_50 : i32 to vector<8x256xi32>
    %125 = arith.cmpi sge, %123, %124 : vector<8x256xi32>
    %c1_i32_51 = arith.constant 1 : i32
    %126 = vector.broadcast %c1_i32_51 : i32 to vector<8x256xi32>
    %127 = arith.addi %4, %126 : vector<8x256xi32>
    %c16_i32_52 = arith.constant 16 : i32
    %128 = vector.broadcast %c16_i32_52 : i32 to vector<8x256xi32>
    %129 = arith.cmpi slt, %127, %128 : vector<8x256xi32>
    %130 = arith.andi %125, %129 : vector<8x256xi1>
    %c-1_i32_53 = arith.constant -1 : i32
    %131 = vector.broadcast %c-1_i32_53 : i32 to vector<8x256xi32>
    %132 = arith.addi %7, %131 : vector<8x256xi32>
    %c0_i32_54 = arith.constant 0 : i32
    %133 = vector.broadcast %c0_i32_54 : i32 to vector<8x256xi32>
    %134 = arith.cmpi sge, %132, %133 : vector<8x256xi32>
    %135 = arith.andi %130, %134 : vector<8x256xi1>
    %c-1_i32_55 = arith.constant -1 : i32
    %136 = vector.broadcast %c-1_i32_55 : i32 to vector<8x256xi32>
    %137 = arith.addi %7, %136 : vector<8x256xi32>
    %c16_i32_56 = arith.constant 16 : i32
    %138 = vector.broadcast %c16_i32_56 : i32 to vector<8x256xi32>
    %139 = arith.cmpi slt, %137, %138 : vector<8x256xi32>
    %140 = arith.andi %135, %139 : vector<8x256xi1>
    %c1_i32_57 = arith.constant 1 : i32
    %141 = vector.broadcast %c1_i32_57 : i32 to vector<8x256xi32>
    %142 = arith.addi %4, %141 : vector<8x256xi32>
    %c0_i32_58 = arith.constant 0 : i32
    %143 = vector.broadcast %c0_i32_58 : i32 to vector<8x256xi32>
    %144 = arith.cmpi sge, %142, %143 : vector<8x256xi32>
    %c1_i32_59 = arith.constant 1 : i32
    %145 = vector.broadcast %c1_i32_59 : i32 to vector<8x256xi32>
    %146 = arith.addi %4, %145 : vector<8x256xi32>
    %c16_i32_60 = arith.constant 16 : i32
    %147 = vector.broadcast %c16_i32_60 : i32 to vector<8x256xi32>
    %148 = arith.cmpi slt, %146, %147 : vector<8x256xi32>
    %149 = arith.andi %144, %148 : vector<8x256xi1>
    %c0_i32_61 = arith.constant 0 : i32
    %150 = vector.broadcast %c0_i32_61 : i32 to vector<8x256xi32>
    %151 = arith.addi %7, %150 : vector<8x256xi32>
    %c0_i32_62 = arith.constant 0 : i32
    %152 = vector.broadcast %c0_i32_62 : i32 to vector<8x256xi32>
    %153 = arith.cmpi sge, %151, %152 : vector<8x256xi32>
    %154 = arith.andi %149, %153 : vector<8x256xi1>
    %c0_i32_63 = arith.constant 0 : i32
    %155 = vector.broadcast %c0_i32_63 : i32 to vector<8x256xi32>
    %156 = arith.addi %7, %155 : vector<8x256xi32>
    %c16_i32_64 = arith.constant 16 : i32
    %157 = vector.broadcast %c16_i32_64 : i32 to vector<8x256xi32>
    %158 = arith.cmpi slt, %156, %157 : vector<8x256xi32>
    %159 = arith.andi %154, %158 : vector<8x256xi1>
    %c1_i32_65 = arith.constant 1 : i32
    %160 = vector.broadcast %c1_i32_65 : i32 to vector<8x256xi32>
    %161 = arith.addi %4, %160 : vector<8x256xi32>
    %c0_i32_66 = arith.constant 0 : i32
    %162 = vector.broadcast %c0_i32_66 : i32 to vector<8x256xi32>
    %163 = arith.cmpi sge, %161, %162 : vector<8x256xi32>
    %c1_i32_67 = arith.constant 1 : i32
    %164 = vector.broadcast %c1_i32_67 : i32 to vector<8x256xi32>
    %165 = arith.addi %4, %164 : vector<8x256xi32>
    %c16_i32_68 = arith.constant 16 : i32
    %166 = vector.broadcast %c16_i32_68 : i32 to vector<8x256xi32>
    %167 = arith.cmpi slt, %165, %166 : vector<8x256xi32>
    %168 = arith.andi %163, %167 : vector<8x256xi1>
    %c1_i32_69 = arith.constant 1 : i32
    %169 = vector.broadcast %c1_i32_69 : i32 to vector<8x256xi32>
    %170 = arith.addi %7, %169 : vector<8x256xi32>
    %c0_i32_70 = arith.constant 0 : i32
    %171 = vector.broadcast %c0_i32_70 : i32 to vector<8x256xi32>
    %172 = arith.cmpi sge, %170, %171 : vector<8x256xi32>
    %173 = arith.andi %168, %172 : vector<8x256xi1>
    %c1_i32_71 = arith.constant 1 : i32
    %174 = vector.broadcast %c1_i32_71 : i32 to vector<8x256xi32>
    %175 = arith.addi %7, %174 : vector<8x256xi32>
    %c16_i32_72 = arith.constant 16 : i32
    %176 = vector.broadcast %c16_i32_72 : i32 to vector<8x256xi32>
    %177 = arith.cmpi slt, %175, %176 : vector<8x256xi32>
    %178 = arith.andi %173, %177 : vector<8x256xi1>
    %c0_73 = arith.constant 0 : index
    %c0_74 = arith.constant 0 : index
    %179 = vector.load %arg3[%c0_73, %c0_74] : memref<8x72xf32, #tpu.memory_space<vmem>>, vector<8x72xf32>
    %c0_75 = arith.constant 0 : index
    %c0_76 = arith.constant 0 : index
    %180 = vector.load %arg4[%c0_75, %c0_76] : memref<8x1xf32, #tpu.memory_space<vmem>>, vector<8x1xf32>
    %c0_77 = arith.constant 0 : index
    %c0_78 = arith.constant 0 : index
    %181 = vector.load %arg5[%c0_77, %c0_78] : memref<8x1xf32, #tpu.memory_space<vmem>>, vector<8x1xf32>
    %c17_i32 = arith.constant 17 : i32
    %182 = tpu.dynamic_rotate %1 by %c17_i32 dim 1 : vector<8x256xf32>, i32 -> vector<8x256xf32>
    %cst = arith.constant 0.000000e+00 : f32
    %183 = vector.broadcast %cst : f32 to vector<8x256xf32>
    %184 = arith.select %26, %182, %183 : vector<8x256xi1>, vector<8x256xf32>
    %c16_i32_79 = arith.constant 16 : i32
    %185 = tpu.dynamic_rotate %1 by %c16_i32_79 dim 1 : vector<8x256xf32>, i32 -> vector<8x256xf32>
    %cst_80 = arith.constant 0.000000e+00 : f32
    %186 = vector.broadcast %cst_80 : f32 to vector<8x256xf32>
    %187 = arith.select %45, %185, %186 : vector<8x256xi1>, vector<8x256xf32>
    %c15_i32 = arith.constant 15 : i32
    %188 = tpu.dynamic_rotate %1 by %c15_i32 dim 1 : vector<8x256xf32>, i32 -> vector<8x256xf32>
    %cst_81 = arith.constant 0.000000e+00 : f32
    %189 = vector.broadcast %cst_81 : f32 to vector<8x256xf32>
    %190 = arith.select %64, %188, %189 : vector<8x256xi1>, vector<8x256xf32>
    %c1_i32_82 = arith.constant 1 : i32
    %191 = tpu.dynamic_rotate %1 by %c1_i32_82 dim 1 : vector<8x256xf32>, i32 -> vector<8x256xf32>
    %cst_83 = arith.constant 0.000000e+00 : f32
    %192 = vector.broadcast %cst_83 : f32 to vector<8x256xf32>
    %193 = arith.select %83, %191, %192 : vector<8x256xi1>, vector<8x256xf32>
    %cst_84 = arith.constant 0.000000e+00 : f32
    %194 = vector.broadcast %cst_84 : f32 to vector<8x256xf32>
    %195 = arith.select %102, %1, %194 : vector<8x256xi1>, vector<8x256xf32>
    %c255_i32 = arith.constant 255 : i32
    %196 = tpu.dynamic_rotate %1 by %c255_i32 dim 1 : vector<8x256xf32>, i32 -> vector<8x256xf32>
    %cst_85 = arith.constant 0.000000e+00 : f32
    %197 = vector.broadcast %cst_85 : f32 to vector<8x256xf32>
    %198 = arith.select %121, %196, %197 : vector<8x256xi1>, vector<8x256xf32>
    %c241_i32 = arith.constant 241 : i32
    %199 = tpu.dynamic_rotate %1 by %c241_i32 dim 1 : vector<8x256xf32>, i32 -> vector<8x256xf32>
    %cst_86 = arith.constant 0.000000e+00 : f32
    %200 = vector.broadcast %cst_86 : f32 to vector<8x256xf32>
    %201 = arith.select %140, %199, %200 : vector<8x256xi1>, vector<8x256xf32>
    %c240_i32 = arith.constant 240 : i32
    %202 = tpu.dynamic_rotate %1 by %c240_i32 dim 1 : vector<8x256xf32>, i32 -> vector<8x256xf32>
    %cst_87 = arith.constant 0.000000e+00 : f32
    %203 = vector.broadcast %cst_87 : f32 to vector<8x256xf32>
    %204 = arith.select %159, %202, %203 : vector<8x256xi1>, vector<8x256xf32>
    %c239_i32 = arith.constant 239 : i32
    %205 = tpu.dynamic_rotate %1 by %c239_i32 dim 1 : vector<8x256xf32>, i32 -> vector<8x256xf32>
    %cst_88 = arith.constant 0.000000e+00 : f32
    %206 = vector.broadcast %cst_88 : f32 to vector<8x256xf32>
    %207 = arith.select %178, %205, %206 : vector<8x256xi1>, vector<8x256xf32>
    %208 = tpu.concatenate %184, %187, %190, %193, %195, %198, %201, %204, %207 in 0 : vector<8x256xf32>, vector<8x256xf32>, vector<8x256xf32>, vector<8x256xf32>, vector<8x256xf32>, vector<8x256xf32>, vector<8x256xf32>, vector<8x256xf32>, vector<8x256xf32> -> vector<72x256xf32>
    %cst_89 = arith.constant dense<0.000000e+00> : vector<8x256xf32>
    %209 = tpu.matmul %179, %208, %cst_89 {dimension_numbers = #tpu.dot_dimension_numbers<[1], [0], [0], [1], [0, 0, 1, 1], [], []>} : vector<8x72xf32>, vector<72x256xf32>, vector<8x256xf32> -> vector<8x256xf32>
    %210 = vector.broadcast %180 : vector<8x1xf32> to vector<8x256xf32>
    %211 = arith.mulf %209, %210 : vector<8x256xf32>
    %212 = vector.broadcast %181 : vector<8x1xf32> to vector<8x256xf32>
    %213 = arith.addf %211, %212 : vector<8x256xf32>
    %cst_90 = arith.constant 0.000000e+00 : f32
    %214 = vector.broadcast %cst_90 : f32 to vector<8x256xf32>
    %215 = arith.maximumf %213, %214 : vector<8x256xf32>
    %c0_91 = arith.constant 0 : index
    %c0_92 = arith.constant 0 : index
    %216 = vector.load %arg6[%c0_91, %c0_92] : memref<8x72xf32, #tpu.memory_space<vmem>>, vector<8x72xf32>
    %c0_93 = arith.constant 0 : index
    %c0_94 = arith.constant 0 : index
    %217 = vector.load %arg7[%c0_93, %c0_94] : memref<8x1xf32, #tpu.memory_space<vmem>>, vector<8x1xf32>
    %c0_95 = arith.constant 0 : index
    %c0_96 = arith.constant 0 : index
    %218 = vector.load %arg8[%c0_95, %c0_96] : memref<8x1xf32, #tpu.memory_space<vmem>>, vector<8x1xf32>
    %c17_i32_97 = arith.constant 17 : i32
    %219 = tpu.dynamic_rotate %215 by %c17_i32_97 dim 1 : vector<8x256xf32>, i32 -> vector<8x256xf32>
    %cst_98 = arith.constant 0.000000e+00 : f32
    %220 = vector.broadcast %cst_98 : f32 to vector<8x256xf32>
    %221 = arith.select %26, %219, %220 : vector<8x256xi1>, vector<8x256xf32>
    %c16_i32_99 = arith.constant 16 : i32
    %222 = tpu.dynamic_rotate %215 by %c16_i32_99 dim 1 : vector<8x256xf32>, i32 -> vector<8x256xf32>
    %cst_100 = arith.constant 0.000000e+00 : f32
    %223 = vector.broadcast %cst_100 : f32 to vector<8x256xf32>
    %224 = arith.select %45, %222, %223 : vector<8x256xi1>, vector<8x256xf32>
    %c15_i32_101 = arith.constant 15 : i32
    %225 = tpu.dynamic_rotate %215 by %c15_i32_101 dim 1 : vector<8x256xf32>, i32 -> vector<8x256xf32>
    %cst_102 = arith.constant 0.000000e+00 : f32
    %226 = vector.broadcast %cst_102 : f32 to vector<8x256xf32>
    %227 = arith.select %64, %225, %226 : vector<8x256xi1>, vector<8x256xf32>
    %c1_i32_103 = arith.constant 1 : i32
    %228 = tpu.dynamic_rotate %215 by %c1_i32_103 dim 1 : vector<8x256xf32>, i32 -> vector<8x256xf32>
    %cst_104 = arith.constant 0.000000e+00 : f32
    %229 = vector.broadcast %cst_104 : f32 to vector<8x256xf32>
    %230 = arith.select %83, %228, %229 : vector<8x256xi1>, vector<8x256xf32>
    %cst_105 = arith.constant 0.000000e+00 : f32
    %231 = vector.broadcast %cst_105 : f32 to vector<8x256xf32>
    %232 = arith.select %102, %215, %231 : vector<8x256xi1>, vector<8x256xf32>
    %c255_i32_106 = arith.constant 255 : i32
    %233 = tpu.dynamic_rotate %215 by %c255_i32_106 dim 1 : vector<8x256xf32>, i32 -> vector<8x256xf32>
    %cst_107 = arith.constant 0.000000e+00 : f32
    %234 = vector.broadcast %cst_107 : f32 to vector<8x256xf32>
    %235 = arith.select %121, %233, %234 : vector<8x256xi1>, vector<8x256xf32>
    %c241_i32_108 = arith.constant 241 : i32
    %236 = tpu.dynamic_rotate %215 by %c241_i32_108 dim 1 : vector<8x256xf32>, i32 -> vector<8x256xf32>
    %cst_109 = arith.constant 0.000000e+00 : f32
    %237 = vector.broadcast %cst_109 : f32 to vector<8x256xf32>
    %238 = arith.select %140, %236, %237 : vector<8x256xi1>, vector<8x256xf32>
    %c240_i32_110 = arith.constant 240 : i32
    %239 = tpu.dynamic_rotate %215 by %c240_i32_110 dim 1 : vector<8x256xf32>, i32 -> vector<8x256xf32>
    %cst_111 = arith.constant 0.000000e+00 : f32
    %240 = vector.broadcast %cst_111 : f32 to vector<8x256xf32>
    %241 = arith.select %159, %239, %240 : vector<8x256xi1>, vector<8x256xf32>
    %c239_i32_112 = arith.constant 239 : i32
    %242 = tpu.dynamic_rotate %215 by %c239_i32_112 dim 1 : vector<8x256xf32>, i32 -> vector<8x256xf32>
    %cst_113 = arith.constant 0.000000e+00 : f32
    %243 = vector.broadcast %cst_113 : f32 to vector<8x256xf32>
    %244 = arith.select %178, %242, %243 : vector<8x256xi1>, vector<8x256xf32>
    %245 = tpu.concatenate %221, %224, %227, %230, %232, %235, %238, %241, %244 in 0 : vector<8x256xf32>, vector<8x256xf32>, vector<8x256xf32>, vector<8x256xf32>, vector<8x256xf32>, vector<8x256xf32>, vector<8x256xf32>, vector<8x256xf32>, vector<8x256xf32> -> vector<72x256xf32>
    %cst_114 = arith.constant dense<0.000000e+00> : vector<8x256xf32>
    %246 = tpu.matmul %216, %245, %cst_114 {dimension_numbers = #tpu.dot_dimension_numbers<[1], [0], [0], [1], [0, 0, 1, 1], [], []>} : vector<8x72xf32>, vector<72x256xf32>, vector<8x256xf32> -> vector<8x256xf32>
    %247 = vector.broadcast %217 : vector<8x1xf32> to vector<8x256xf32>
    %248 = arith.mulf %246, %247 : vector<8x256xf32>
    %249 = vector.broadcast %218 : vector<8x1xf32> to vector<8x256xf32>
    %250 = arith.addf %248, %249 : vector<8x256xf32>
    %251 = arith.addf %250, %1 : vector<8x256xf32>
    %cst_115 = arith.constant 0.000000e+00 : f32
    %252 = vector.broadcast %cst_115 : f32 to vector<8x256xf32>
    %253 = arith.maximumf %251, %252 : vector<8x256xf32>
    %c0_116 = arith.constant 0 : index
    %c0_117 = arith.constant 0 : index
    %c0_118 = arith.constant 0 : index
    %254 = vector.load %arg9[%c0_116, %c0_117, %c0_118] : memref<1x8x256xf32, #tpu.memory_space<vmem>>, vector<1x8x256xf32>
    %255 = vector.shape_cast %254 : vector<1x8x256xf32> to vector<8x256xf32>
    %256 = vector.shape_cast %253 : vector<8x256xf32> to vector<1x8x256xf32>
    tpu.vector_store %arg9[%c0_116, %c0_117, %c0_118], %256 {strides = array<i32>} : memref<1x8x256xf32, #tpu.memory_space<vmem>>, vector<1x8x256xf32>,
    return
  }
  func.func @transform_0(%arg0: i32) -> (i32, i32, i32) {
    %c0_i32 = arith.constant 0 : i32
    %c0_i32_0 = arith.constant 0 : i32
    %c0_i32_1 = arith.constant 0 : i32
    return %arg0, %c0_i32, %c0_i32_0 : i32, i32, i32
  }
  func.func @transform_1(%arg0: i32) -> (i32, i32) {
    %c0_i32 = arith.constant 0 : i32
    %c0_i32_0 = arith.constant 0 : i32
    %c0_i32_1 = arith.constant 0 : i32
    return %c0_i32, %c0_i32_0 : i32, i32
  }
  func.func @transform_2(%arg0: i32) -> (i32, i32) {
    %c0_i32 = arith.constant 0 : i32
    %c0_i32_0 = arith.constant 0 : i32
    %c0_i32_1 = arith.constant 0 : i32
    return %c0_i32, %c0_i32_0 : i32, i32
  }
  func.func @transform_3(%arg0: i32) -> (i32, i32) {
    %c0_i32 = arith.constant 0 : i32
    %c0_i32_0 = arith.constant 0 : i32
    %c0_i32_1 = arith.constant 0 : i32
    return %c0_i32, %c0_i32_0 : i32, i32
  }
  func.func @transform_4(%arg0: i32) -> (i32, i32) {
    %c0_i32 = arith.constant 0 : i32
    %c0_i32_0 = arith.constant 0 : i32
    %c0_i32_1 = arith.constant 0 : i32
    return %c0_i32, %c0_i32_0 : i32, i32
  }
  func.func @transform_5(%arg0: i32) -> (i32, i32) {
    %c0_i32 = arith.constant 0 : i32
    %c0_i32_0 = arith.constant 0 : i32
    %c0_i32_1 = arith.constant 0 : i32
    return %c0_i32, %c0_i32_0 : i32, i32
  }
  func.func @transform_6(%arg0: i32) -> (i32, i32) {
    %c0_i32 = arith.constant 0 : i32
    %c0_i32_0 = arith.constant 0 : i32
    %c0_i32_1 = arith.constant 0 : i32
    return %c0_i32, %c0_i32_0 : i32, i32
  }
  func.func @transform_7(%arg0: i32) -> (i32, i32) {
    %c0_i32 = arith.constant 0 : i32
    %c0_i32_0 = arith.constant 0 : i32
    %c0_i32_1 = arith.constant 0 : i32
    return %c0_i32, %c0_i32_0 : i32, i32
  }
  func.func @transform_8(%arg0: i32) -> (i32, i32, i32) {
    %c0_i32 = arith.constant 0 : i32
    %c0_i32_0 = arith.constant 0 : i32
    %c0_i32_1 = arith.constant 0 : i32
    return %arg0, %c0_i32, %c0_i32_0 : i32, i32, i32
  }
}

</mosaic_0001>

<llo_original>
// kernel: tpu_custom_call.1
$region0: #{tpu_custom_call.1}
  #allocation0 [shape = 'u32[]', space=smem, size = 0x4, offset = 0x4, fixed_abs, tag = 'smem constant byte address 0x4 - core index']
  #allocation1 [shape = 'u32[72,128]{1,0:T(1,128)}', space=vmem, size = 0x9000, scoped, tag = 'internal scratch']
  %s0 = inlined_call_operand.hbm [shape: f32[2,8,256], index: 0, kind: input, shape index: {}]
  %s1 = inlined_call_operand.vmem [shape: s32[2,256], index: 1, kind: input, shape index: {}]
  %s2 = inlined_call_operand.vmem [shape: f32[8,72], index: 2, kind: input, shape index: {}]
  %s3 = inlined_call_operand.vmem [shape: f32[8,1], index: 3, kind: input, shape index: {}]
  %s4 = inlined_call_operand.vmem [shape: f32[8,1], index: 4, kind: input, shape index: {}]
  %s5 = inlined_call_operand.vmem [shape: f32[8,72], index: 5, kind: input, shape index: {}]
  %s6 = inlined_call_operand.vmem [shape: f32[8,1], index: 6, kind: input, shape index: {}]
  %s7 = inlined_call_operand.vmem [shape: f32[8,1], index: 7, kind: input, shape index: {}]
  %s8 = inlined_call_operand.hbm [shape: f32[2,8,256], index: 8, kind: output, shape index: {}]
  %s9 = sld [smem:[#allocation0]]
  $region69: #{tpu_custom_call.1} parent=0
    _
  %s11 = ssub.s32 1, %s9
  %s12 = scalar_select 0, %s11, %s9
  $region1: #{tpu_custom_call.1} parent=0
    #allocation2 [shape = 'u8[16384]{0}', space=vmem, size = 0x4000, scoped, tag = 'input window, operand 0']
    #allocation3 [shape = 's32[2]{0}', space=sflag, size = 0x8, scoped, tag = 'scoped memory for tpu_custom_call.1']
    #allocation4 [shape = 's32[2]{0}', space=sflag, size = 0x8, scoped, tag = 'scoped memory for tpu_custom_call.1']
    #allocation5 [shape = 'u8[16384]{0}', space=vmem, size = 0x4000, scoped, tag = 'output window, operand 0']
    %13 = vsyncpa [#allocation3], 0
    %s14 = scalar_lea.sflag [#allocation3], 1
    %15 = vsyncpa %s14, 0
    %16 = vsyncpa [#allocation4], 0
    %s17 = scalar_lea.sflag [#allocation4], 1
    %18 = vsyncpa %s17, 0
    loop: start=0, step=1, limit=4
    $region2: #{tpu_custom_call.1} parent=1 // loop_pre_header
      _
    $region3: #{tpu_custom_call.1} parent=1 // loop_header
      %s20 = sphi 0, %s24
      %p21 = scmp.ge.s32.totalorder %s20, 4
      %s30 = sphi 0, %s32
      %s33 = sphi 0, %s30
      %s34 = sphi 0, %s33
      %s50 = sphi 0, %s34
      %s54 = sphi 0, %s54
      %s56 = sphi 0, %s54
      %s57 = sphi 0, %s56
      %s71 = sphi 0, %s57
      %s75 = sphi 0, %s75
      %s77 = sphi 0, %s75
      %s78 = sphi 0, %s77
      %s92 = sphi 0, %s78
      %s96 = sphi 0, %s96
      %s98 = sphi 0, %s96
      %s99 = sphi 0, %s98
      %s113 = sphi 0, %s99
      %s117 = sphi 0, %s117
      %s119 = sphi 0, %s117
      %s120 = sphi 0, %s119
      %s134 = sphi 0, %s120
      %s138 = sphi 0, %s138
      %s140 = sphi 0, %s138
      %s141 = sphi 0, %s140
      %s155 = sphi 0, %s141
      %s159 = sphi 0, %s159
      %s161 = sphi 0, %s159
      %s162 = sphi 0, %s161
      %s176 = sphi 0, %s162
      %s180 = sphi 0, %s180
      %s182 = sphi 0, %s180
      %s183 = sphi 0, %s182
      %s197 = sphi 0, %s183
      %s203 = sphi 0, %s205
      %s206 = sphi 0, %s203
      %s207 = sphi 0, %s206
      %s223 = sphi 0, %s207
    $region4: #{tpu_custom_call.1} parent=1 // loop_header_branch
      %23 = sbr.rel (%p21) target = $region8
    $region5: #{tpu_custom_call.1} parent=1 // loop_body
      %s25 = ssub.s32 %s20, 1
      %s26 = ssub.s32 %s20, 2
      %s27 = sadd.s32 %s20, 1
      %s28 = ssub.s32 %s20, %s27
      %p29 = scmp.eq.s32.totalorder %s28, 0
      %s31 = sadd.s32 %s30, 1
      %s32 = scalar_select %p29, %s30, %s31
      %p35 = pneg %p29
      %p36 = scmp.eq.s32.totalorder %s20, 1
      %p37 = por %p35, %p36
      %p38 = scmp.ne.s32.totalorder %s30, %s33
      %p39 = scmp.eq.s32.totalorder %s20, 0
      %p40 = por %p38, %p39
      %p41 = scmp.ne.s32.totalorder %s30, %s33
      %p42 = scmp.eq.s32.totalorder %s25, 1
      %p43 = por %p41, %p42
      %p44 = scmp.ne.s32.totalorder %s33, %s34
      %p45 = scmp.eq.s32.totalorder %s25, 0
      %p46 = por %p44, %p45
      %p47 = scmp.ne.s32.totalorder %s33, %s34
      %p48 = scmp.eq.s32.totalorder %s26, 1
      %p49 = por %p47, %p48
      %p51 = scmp.ne.s32.totalorder %s34, %s50
      %p52 = scmp.eq.s32.totalorder %s26, 0
      %p53 = por %p51, %p52
      %s55 = sadd.s32 %s54, 1
      %p58 = scmp.eq.s32.totalorder %s20, 1
      %p59 = scmp.ne.s32.totalorder %s54, %s56
      %p60 = scmp.eq.s32.totalorder %s20, 0
      %p61 = por %p59, %p60
      %p62 = scmp.ne.s32.totalorder %s54, %s56
      %p63 = scmp.eq.s32.totalorder %s25, 1
      %p64 = por %p62, %p63
      %p65 = scmp.ne.s32.totalorder %s56, %s57
      %p66 = scmp.eq.s32.totalorder %s25, 0
      %p67 = por %p65, %p66
      %p68 = scmp.ne.s32.totalorder %s56, %s57
      %p69 = scmp.eq.s32.totalorder %s26, 1
      %p70 = por %p68, %p69
      %p72 = scmp.ne.s32.totalorder %s57, %s71
      %p73 = scmp.eq.s32.totalorder %s26, 0
      %p74 = por %p72, %p73
      %s76 = sadd.s32 %s75, 1
      %p79 = scmp.eq.s32.totalorder %s20, 1
      %p80 = scmp.ne.s32.totalorder %s75, %s77
      %p81 = scmp.eq.s32.totalorder %s20, 0
      %p82 = por %p80, %p81
      %p83 = scmp.ne.s32.totalorder %s75, %s77
      %p84 = scmp.eq.s32.totalorder %s25, 1
      %p85 = por %p83, %p84
      %p86 = scmp.ne.s32.totalorder %s77, %s78
      %p87 = scmp.eq.s32.totalorder %s25, 0
      %p88 = por %p86, %p87
      %p89 = scmp.ne.s32.totalorder %s77, %s78
      %p90 = scmp.eq.s32.totalorder %s26, 1
      %p91 = por %p89, %p90
      %p93 = scmp.ne.s32.totalorder %s78, %s92
      %p94 = scmp.eq.s32.totalorder %s26, 0
      %p95 = por %p93, %p94
      %s97 = sadd.s32 %s96, 1
      %p100 = scmp.eq.s32.totalorder %s20, 1
      %p101 = scmp.ne.s32.totalorder %s96, %s98
      %p102 = scmp.eq.s32.totalorder %s20, 0
      %p103 = por %p101, %p102
      %p104 = scmp.ne.s32.totalorder %s96, %s98
      %p105 = scmp.eq.s32.totalorder %s25, 1
      %p106 = por %p104, %p105
      %p107 = scmp.ne.s32.totalorder %s98, %s99
      %p108 = scmp.eq.s32.totalorder %s25, 0
      %p109 = por %p107, %p108
      %p110 = scmp.ne.s32.totalorder %s98, %s99
      %p111 = scmp.eq.s32.totalorder %s26, 1
      %p112 = por %p110, %p111
      %p114 = scmp.ne.s32.totalorder %s99, %s113
      %p115 = scmp.eq.s32.totalorder %s26, 0
      %p116 = por %p114, %p115
      %s118 = sadd.s32 %s117, 1
      %p121 = scmp.eq.s32.totalorder %s20, 1
      %p122 = scmp.ne.s32.totalorder %s117, %s119
      %p123 = scmp.eq.s32.totalorder %s20, 0
      %p124 = por %p122, %p123
      %p125 = scmp.ne.s32.totalorder %s117, %s119
      %p126 = scmp.eq.s32.totalorder %s25, 1
      %p127 = por %p125, %p126
      %p128 = scmp.ne.s32.totalorder %s119, %s120
      %p129 = scmp.eq.s32.totalorder %s25, 0
      %p130 = por %p128, %p129
      %p131 = scmp.ne.s32.totalorder %s119, %s120
      %p132 = scmp.eq.s32.totalorder %s26, 1
      %p133 = por %p131, %p132
      %p135 = scmp.ne.s32.totalorder %s120, %s134
      %p136 = scmp.eq.s32.totalorder %s26, 0
      %p137 = por %p135, %p136
      %s139 = sadd.s32 %s138, 1
      %p142 = scmp.eq.s32.totalorder %s20, 1
      %p143 = scmp.ne.s32.totalorder %s138, %s140
      %p144 = scmp.eq.s32.totalorder %s20, 0
      %p145 = por %p143, %p144
      %p146 = scmp.ne.s32.totalorder %s138, %s140
      %p147 = scmp.eq.s32.totalorder %s25, 1
      %p148 = por %p146, %p147
      %p149 = scmp.ne.s32.totalorder %s140, %s141
      %p150 = scmp.eq.s32.totalorder %s25, 0
      %p151 = por %p149, %p150
      %p152 = scmp.ne.s32.totalorder %s140, %s141
      %p153 = scmp.eq.s32.totalorder %s26, 1
      %p154 = por %p152, %p153
      %p156 = scmp.ne.s32.totalorder %s141, %s155
      %p157 = scmp.eq.s32.totalorder %s26, 0
      %p158 = por %p156, %p157
      %s160 = sadd.s32 %s159, 1
      %p163 = scmp.eq.s32.totalorder %s20, 1
      %p164 = scmp.ne.s32.totalorder %s159, %s161
      %p165 = scmp.eq.s32.totalorder %s20, 0
      %p166 = por %p164, %p165
      %p167 = scmp.ne.s32.totalorder %s159, %s161
      %p168 = scmp.eq.s32.totalorder %s25, 1
      %p169 = por %p167, %p168
      %p170 = scmp.ne.s32.totalorder %s161, %s162
      %p171 = scmp.eq.s32.totalorder %s25, 0
      %p172 = por %p170, %p171
      %p173 = scmp.ne.s32.totalorder %s161, %s162
      %p174 = scmp.eq.s32.totalorder %s26, 1
      %p175 = por %p173, %p174
      %p177 = scmp.ne.s32.totalorder %s162, %s176
      %p178 = scmp.eq.s32.totalorder %s26, 0
      %p179 = por %p177, %p178
      %s181 = sadd.s32 %s180, 1
      %p184 = scmp.eq.s32.totalorder %s20, 1
      %p185 = scmp.ne.s32.totalorder %s180, %s182
      %p186 = scmp.eq.s32.totalorder %s20, 0
      %p187 = por %p185, %p186
      %p188 = scmp.ne.s32.totalorder %s180, %s182
      %p189 = scmp.eq.s32.totalorder %s25, 1
      %p190 = por %p188, %p189
      %p191 = scmp.ne.s32.totalorder %s182, %s183
      %p192 = scmp.eq.s32.totalorder %s25, 0
      %p193 = por %p191, %p192
      %p194 = scmp.ne.s32.totalorder %s182, %s183
      %p195 = scmp.eq.s32.totalorder %s26, 1
      %p196 = por %p194, %p195
      %p198 = scmp.ne.s32.totalorder %s183, %s197
      %p199 = scmp.eq.s32.totalorder %s26, 0
      %p200 = por %p198, %p199
      %s201 = ssub.s32 %s20, %s27
      %p202 = scmp.eq.s32.totalorder %s201, 0
      %s204 = sadd.s32 %s203, 1
      %s205 = scalar_select %p202, %s203, %s204
      %p208 = pneg %p202
      %p209 = scmp.eq.s32.totalorder %s20, 1
      %p210 = por %p208, %p209
      %p211 = scmp.ne.s32.totalorder %s203, %s206
      %p212 = scmp.eq.s32.totalorder %s20, 0
      %p213 = por %p211, %p212
      %p214 = scmp.ne.s32.totalorder %s203, %s206
      %p215 = scmp.eq.s32.totalorder %s25, 1
      %p216 = por %p214, %p215
      %p217 = scmp.ne.s32.totalorder %s206, %s207
      %p218 = scmp.eq.s32.totalorder %s25, 0
      %p219 = por %p217, %p218
      %p220 = scmp.ne.s32.totalorder %s206, %s207
      %p221 = scmp.eq.s32.totalorder %s26, 1
      %p222 = por %p220, %p221
      %p224 = scmp.ne.s32.totalorder %s207, %s223
      %p225 = scmp.eq.s32.totalorder %s26, 0
      %p226 = por %p224, %p225
      %p227 = scmp.le.s32.totalorder 1, %s20
      %p228 = scmp.lt.s32.totalorder %s20, 3
      %p229 = pnand %p227, %p228
      %p230 = pneg %p229
      // Predicated region
      $region9: #{tpu_custom_call.1} parent=5 // pred_check
        _
      $region10: #{tpu_custom_call.1} parent=5 // pred_check_branch
        %232 = sbr.rel (%p229) target = $region12
      $region11: #{tpu_custom_call.1} parent=5 // pred_region
        %s233 = ssub.s32 %s20, 1
        // Predicated region
        $region13: #{tpu_custom_call.1} parent=11 // pred_check
          %p234 = pneg %p67
        $region14: #{tpu_custom_call.1} parent=11 // pred_check_branch
          %236 = sbr.rel (%p234) target = $region16
        $region15: #{tpu_custom_call.1} parent=11 // pred_region
          _
        $region16: #{tpu_custom_call.1} parent=11 // pred_fallthru
          _
        // Predicated region
        $region17: #{tpu_custom_call.1} parent=11 // pred_check
          %p237 = pneg %p88
        $region18: #{tpu_custom_call.1} parent=11 // pred_check_branch
          %239 = sbr.rel (%p237) target = $region20
        $region19: #{tpu_custom_call.1} parent=11 // pred_region
          _
        $region20: #{tpu_custom_call.1} parent=11 // pred_fallthru
          _
        // Predicated region
        $region21: #{tpu_custom_call.1} parent=11 // pred_check
          %p240 = pneg %p109
        $region22: #{tpu_custom_call.1} parent=11 // pred_check_branch
          %242 = sbr.rel (%p240) target = $region24
        $region23: #{tpu_custom_call.1} parent=11 // pred_region
          _
        $region24: #{tpu_custom_call.1} parent=11 // pred_fallthru
          _
        // Predicated region
        $region25: #{tpu_custom_call.1} parent=11 // pred_check
          %p243 = pneg %p130
        $region26: #{tpu_custom_call.1} parent=11 // pred_check_branch
          %245 = sbr.rel (%p243) target = $region28
        $region27: #{tpu_custom_call.1} parent=11 // pred_region
          _
        $region28: #{tpu_custom_call.1} parent=11 // pred_fallthru
          _
        // Predicated region
        $region29: #{tpu_custom_call.1} parent=11 // pred_check
          %p246 = pneg %p151
        $region30: #{tpu_custom_call.1} parent=11 // pred_check_branch
          %248 = sbr.rel (%p246) target = $region32
        $region31: #{tpu_custom_call.1} parent=11 // pred_region
          _
        $region32: #{tpu_custom_call.1} parent=11 // pred_fallthru
          _
        // Predicated region
        $region33: #{tpu_custom_call.1} parent=11 // pred_check
          %p249 = pneg %p172
        $region34: #{tpu_custom_call.1} parent=11 // pred_check_branch
          %251 = sbr.rel (%p249) target = $region36
        $region35: #{tpu_custom_call.1} parent=11 // pred_region
          _
        $region36: #{tpu_custom_call.1} parent=11 // pred_fallthru
          _
        // Predicated region
        $region37: #{tpu_custom_call.1} parent=11 // pred_check
          %p252 = pneg %p193
        $region38: #{tpu_custom_call.1} parent=11 // pred_check_branch
          %254 = sbr.rel (%p252) target = $region40
        $region39: #{tpu_custom_call.1} parent=11 // pred_region
          _
        $region40: #{tpu_custom_call.1} parent=11 // pred_fallthru
          _
      $region12: #{tpu_custom_call.1} parent=5 // pred_fallthru
        _
      %p255 = scmp.lt.s32.totalorder %s20, 2
      // Predicated region
      $region41: #{tpu_custom_call.1} parent=5 // pred_check
        %p256 = pneg %p255
      $region42: #{tpu_custom_call.1} parent=5 // pred_check_branch
        %258 = sbr.rel (%p256) target = $region44
      $region43: #{tpu_custom_call.1} parent=5 // pred_region
        // Predicated region
        $region45: #{tpu_custom_call.1} parent=43 // pred_check
          %p259 = pneg %p40
        $region46: #{tpu_custom_call.1} parent=43 // pred_check_branch
          %261 = sbr.rel (%p259) target = $region48
        $region47: #{tpu_custom_call.1} parent=43 // pred_region
          %s262 = sand.u32 %s30, 1
          %s263 = scalar_lea.sflag [#allocation3], %s262
          %s264 = sand.u32 %s30, 1
          %s265 = smul.addr %s264, 16
          %s266 = scalar_lea.vmem [#allocation2], %s265
          %268 = vsyncadd %s263, 0
          %s269 = smul.addr %s20, 2
          %s270 = smul.addr %s269, 8
          %s271 = scalar_lea.hbm %s0, %s270
          %s273 = sshll.u32 %s271, 4
          %s274 = int_to_ptr.hbm [resolvable:$true] %s273
          %s275 = sshll.u32 %s266, 4
          %s276 = int_to_ptr.vmem [resolvable:$true] %s275
          %278 = dma.hbm_to_vmem [thread:$0]  %s274, 256, %s276, %s263
        $region48: #{tpu_custom_call.1} parent=43 // pred_fallthru
          _
      $region44: #{tpu_custom_call.1} parent=5 // pred_fallthru
        _
      %p279 = scmp.le.s32.totalorder 1, %s20
      %p280 = scmp.lt.s32.totalorder %s20, 3
      %p281 = pnand %p279, %p280
      %p282 = pneg %p281
      // Predicated region
      $region49: #{tpu_custom_call.1} parent=5 // pred_check
        _
      $region50: #{tpu_custom_call.1} parent=5 // pred_check_branch
        %284 = sbr.rel (%p281) target = $region52
      $region51: #{tpu_custom_call.1} parent=5 // pred_region
        %s285 = ssub.s32 %s20, 1
        %s286 = sand.u32 %s33, 1
        %s287 = scalar_lea.sflag [#allocation3], %s286
        %s288 = sand.u32 %s33, 1
        %s289 = smul.addr %s288, 16
        %s290 = scalar_lea.vmem [#allocation2], %s289
        // Predicated region
        $region53: #{tpu_custom_call.1} parent=51 // pred_check
          %p291 = pneg %p46
        $region54: #{tpu_custom_call.1} parent=51 // pred_check_branch
          %293 = sbr.rel (%p291) target = $region56
        $region55: #{tpu_custom_call.1} parent=51 // pred_region
          %295 = dma.done %s287, 256
        $region56: #{tpu_custom_call.1} parent=51 // pred_fallthru
          _
        %s296 = sand.u32 %s33, 1
        %s297 = scalar_lea.sflag [#allocation3], %s296
        %s298 = sand.u32 %s33, 1
        %s299 = smul.addr %s298, 16
        %s300 = scalar_lea.vmem [#allocation2], %s299
        %p301 = pneg %p46
        %p302 = pneg %p43
        %p303 = pneg %p67
        %p304 = pneg %p64
        %p305 = pneg %p88
        %p306 = pneg %p85
        %p307 = pneg %p109
        %p308 = pneg %p106
        %p309 = pneg %p130
        %p310 = pneg %p127
        %p311 = pneg %p151
        %p312 = pneg %p148
        %p313 = pneg %p172
        %p314 = pneg %p169
        %p315 = pneg %p193
        %p316 = pneg %p190
        %p317 = pneg %p219
        %p318 = pneg %p216
        %s319 = sand.u32 %s206, 1
        %s320 = scalar_lea.sflag [#allocation4], %s319
        %s321 = sand.u32 %s206, 1
        %s322 = smul.addr %s321, 16
        %s323 = scalar_lea.vmem [#allocation5], %s322
        %v324 = vld [vmem:[%s290] sm:$0xff]
        %v325 = vld [vmem:[%s290 + $0x8] sm:$0xff]
        %v326 = vld [vmem:[%s1] ss:$2 sm:$0x3]
        %v327 = vperm.slane %v326, 0
        %v328 = vperm.slane %v326, 1
        %s329 = scalar_lea.vmem %s1, 1
        %v330 = vld [vmem:[%s329] ss:$2 sm:$0x3]
        %v331 = vperm.slane %v330, 0
        %v332 = vperm.slane %v330, 1
        %v333 = vadd.s32 %v327, 4294967295
        %v334 = vadd.s32 %v328, 4294967295
        %vm335 = vcmp.ge.s32.totalorder %v333, 0
        %vm336 = vcmp.ge.s32.totalorder %v334, 0
        %vm337 = vcmp.lt.s32.totalorder %v333, 16
        %vm338 = vcmp.lt.s32.totalorder %v334, 16
        %vm339 = vmand %vm335, %vm337
        %vm340 = vmand %vm336, %vm338
        %v341 = vadd.s32 %v331, 4294967295
        %v342 = vadd.s32 %v332, 4294967295
        %vm343 = vcmp.ge.s32.totalorder %v341, 0
        %vm344 = vcmp.ge.s32.totalorder %v342, 0
        %vm345 = vmand %vm339, %vm343
        %vm346 = vmand %vm340, %vm344
        %vm347 = vcmp.lt.s32.totalorder %v341, 16
        %vm348 = vcmp.lt.s32.totalorder %v342, 16
        %vm349 = vmand %vm345, %vm347
        %vm350 = vmand %vm346, %vm348
        %vm351 = vcmp.ge.s32.totalorder %v331, 0
        %vm352 = vcmp.ge.s32.totalorder %v332, 0
        %vm353 = vmand %vm339, %vm351
        %vm354 = vmand %vm340, %vm352
        %vm355 = vcmp.lt.s32.totalorder %v331, 16
        %vm356 = vcmp.lt.s32.totalorder %v332, 16
        %vm357 = vmand %vm353, %vm355
        %vm358 = vmand %vm354, %vm356
        %v359 = vadd.s32 %v331, 1
        %v360 = vadd.s32 %v332, 1
        %vm361 = vcmp.ge.s32.totalorder %v359, 0
        %vm362 = vcmp.ge.s32.totalorder %v360, 0
        %vm363 = vmand %vm339, %vm361
        %vm364 = vmand %vm340, %vm362
        %vm365 = vcmp.lt.s32.totalorder %v359, 16
        %vm366 = vcmp.lt.s32.totalorder %v360, 16
        %vm367 = vmand %vm363, %vm365
        %vm368 = vmand %vm364, %vm366
        %vm369 = vcmp.ge.s32.totalorder %v327, 0
        %vm370 = vcmp.ge.s32.totalorder %v328, 0
        %vm371 = vcmp.lt.s32.totalorder %v327, 16
        %vm372 = vcmp.lt.s32.totalorder %v328, 16
        %vm373 = vmand %vm369, %vm371
        %vm374 = vmand %vm370, %vm372
        %vm375 = vmand %vm373, %vm343
        %vm376 = vmand %vm374, %vm344
        %vm377 = vmand %vm375, %vm347
        %vm378 = vmand %vm376, %vm348
        %vm379 = vmand %vm373, %vm351
        %vm380 = vmand %vm374, %vm352
        %vm381 = vmand %vm379, %vm355
        %vm382 = vmand %vm380, %vm356
        %vm383 = vmand %vm373, %vm361
        %vm384 = vmand %vm374, %vm362
        %vm385 = vmand %vm383, %vm365
        %vm386 = vmand %vm384, %vm366
        %v387 = vadd.s32 %v327, 1
        %v388 = vadd.s32 %v328, 1
        %vm389 = vcmp.ge.s32.totalorder %v387, 0
        %vm390 = vcmp.ge.s32.totalorder %v388, 0
        %vm391 = vcmp.lt.s32.totalorder %v387, 16
        %vm392 = vcmp.lt.s32.totalorder %v388, 16
        %vm393 = vmand %vm389, %vm391
        %vm394 = vmand %vm390, %vm392
        %vm395 = vmand %vm393, %vm343
        %vm396 = vmand %vm394, %vm344
        %vm397 = vmand %vm395, %vm347
        %vm398 = vmand %vm396, %vm348
        %vm399 = vmand %vm393, %vm351
        %vm400 = vmand %vm394, %vm352
        %vm401 = vmand %vm399, %vm355
        %vm402 = vmand %vm400, %vm356
        %vm403 = vmand %vm393, %vm361
        %vm404 = vmand %vm394, %vm362
        %vm405 = vmand %vm403, %vm365
        %vm406 = vmand %vm404, %vm366
        %v407 = vld [vmem:[%s2] sm:$0xff]
        %v408 = vld [vmem:[%s3] sm:$0xff]
        %v409 = vld [vmem:[%s4] sm:$0xff]
        %410 = vrot.lane.b32.xlu0 %v324, 17
        %v411 = vpop.permute.xlu0 %410
        %412 = vrot.lane.b32.xlu0 %v325, 17
        %v413 = vpop.permute.xlu0 %412
        %v414 = vlaneseq
        %v415 = vand.u32 %v414, 127
        %vm416 = vcmp.lt.s32.totalorder %v415, 17
        %v417 = vsel %vm416, %v411, %v413
        %v418 = vsel %vm416, %v413, %v411
        %v419 = vsel %vm349, %v418, 0.0
        %v420 = vsel %vm350, %v417, 0.0
        %421 = vrot.lane.b32.xlu0 %v324, 16
        %v422 = vpop.permute.xlu0 %421
        %423 = vrot.lane.b32.xlu0 %v325, 16
        %v424 = vpop.permute.xlu0 %423
        %vm425 = vcmp.lt.s32.totalorder %v415, 16
        %v426 = vsel %vm425, %v422, %v424
        %v427 = vsel %vm425, %v424, %v422
        %v428 = vsel %vm357, %v427, 0.0
        %v429 = vsel %vm358, %v426, 0.0
        %430 = vrot.lane.b32.xlu0 %v324, 15
        %v431 = vpop.permute.xlu0 %430
        %432 = vrot.lane.b32.xlu0 %v325, 15
        %v433 = vpop.permute.xlu0 %432
        %vm434 = vcmp.lt.s32.totalorder %v415, 15
        %v435 = vsel %vm434, %v431, %v433
        %v436 = vsel %vm434, %v433, %v431
        %v437 = vsel %vm367, %v436, 0.0
        %v438 = vsel %vm368, %v435, 0.0
        %439 = vrot.lane.b32.xlu0 %v324, 1
        %v440 = vpop.permute.xlu0 %439
        %441 = vrot.lane.b32.xlu0 %v325, 1
        %v442 = vpop.permute.xlu0 %441
        %vm443 = vcmp.lt.s32.totalorder %v415, 1
        %v444 = vsel %vm443, %v440, %v442
        %v445 = vsel %vm443, %v442, %v440
        %v446 = vsel %vm377, %v445, 0.0
        %v447 = vsel %vm378, %v444, 0.0
        %v448 = vsel %vm381, %v324, 0.0
        %v449 = vsel %vm382, %v325, 0.0
        %450 = vrot.lane.b32.xlu0 %v324, 127
        %v451 = vpop.permute.xlu0 %450
        %452 = vrot.lane.b32.xlu0 %v325, 127
        %v453 = vpop.permute.xlu0 %452
        %vm454 = vcmp.lt.s32.totalorder %v415, 127
        %v455 = vsel %vm454, %v451, %v453
        %v456 = vsel %vm454, %v453, %v451
        %v457 = vsel %vm385, %v455, 0.0
        %v458 = vsel %vm386, %v456, 0.0
        %459 = vrot.lane.b32.xlu0 %v324, 113
        %v460 = vpop.permute.xlu0 %459
        %461 = vrot.lane.b32.xlu0 %v325, 113
        %v462 = vpop.permute.xlu0 %461
        %vm463 = vcmp.lt.s32.totalorder %v415, 113
        %v464 = vsel %vm463, %v460, %v462
        %v465 = vsel %vm463, %v462, %v460
        %v466 = vsel %vm397, %v464, 0.0
        %v467 = vsel %vm398, %v465, 0.0
        %468 = vrot.lane.b32.xlu0 %v324, 112
        %v469 = vpop.permute.xlu0 %468
        %470 = vrot.lane.b32.xlu0 %v325, 112
        %v471 = vpop.permute.xlu0 %470
        %vm472 = vcmp.lt.s32.totalorder %v415, 112
        %v473 = vsel %vm472, %v469, %v471
        %v474 = vsel %vm472, %v471, %v469
        %v475 = vsel %vm401, %v473, 0.0
        %v476 = vsel %vm402, %v474, 0.0
        %477 = vrot.lane.b32.xlu0 %v324, 111
        %v478 = vpop.permute.xlu0 %477
        %479 = vrot.lane.b32.xlu0 %v325, 111
        %v480 = vpop.permute.xlu0 %479
        %vm481 = vcmp.lt.s32.totalorder %v415, 111
        %v482 = vsel %vm481, %v478, %v480
        %v483 = vsel %vm481, %v480, %v478
        %v484 = vsel %vm405, %v482, 0.0
        %v485 = vsel %vm406, %v483, 0.0
        %vm486 = vcmask 588800
        %v488 = vsel %vm486, %v407, 0
        %490 = vmatpush.msra.mxu0 0.0
        %491 = vmatpush.msra.mxu0 0.0
        %492 = vmatpush.msra.mxu0 0.0
        %493 = vmatpush.msra.mxu0 0.0
        %494 = vmatpush.msra.mxu0 0.0
        %495 = vmatpush.msra.mxu0 0.0
        %496 = vmatpush.msra.mxu0 0.0
        %497 = vmatpush.msra.mxu0 %v484
        %498 = vmatpush.msra.mxu0 %v475
        %499 = vmatpush.msra.mxu0 %v466
        %500 = vmatpush.msra.mxu0 %v457
        %501 = vmatpush.msra.mxu0 %v448
        %502 = vmatpush.msra.mxu0 %v446
        %503 = vmatpush.msra.mxu0 %v437
        %504 = vmatpush.msra.mxu0 %v428
        %505 = vmatpush.msra.mxu0 %v419
        %506 = vmatmul.f32.gmra.mxu0 %v488
        %v507 = vpop.f32.mrf.mxu0
        %v508 = vadd.f32 0.0, %v507
        %509 = vdwg.mxu0
        %510 = vmatpush.msra.mxu0 0.0
        %511 = vmatpush.msra.mxu0 0.0
        %512 = vmatpush.msra.mxu0 0.0
        %513 = vmatpush.msra.mxu0 0.0
        %514 = vmatpush.msra.mxu0 0.0
        %515 = vmatpush.msra.mxu0 0.0
        %516 = vmatpush.msra.mxu0 0.0
        %517 = vmatpush.msra.mxu0 %v485
        %518 = vmatpush.msra.mxu0 %v476
        %519 = vmatpush.msra.mxu0 %v467
        %520 = vmatpush.msra.mxu0 %v458
        %521 = vmatpush.msra.mxu0 %v449
        %522 = vmatpush.msra.mxu0 %v447
        %523 = vmatpush.msra.mxu0 %v438
        %524 = vmatpush.msra.mxu0 %v429
        %525 = vmatpush.msra.mxu0 %v420
        %526 = vmatmul.f32.gmra.mxu0 %v488
        %v527 = vpop.f32.mrf.mxu0
        %v528 = vadd.f32 0.0, %v527
        %529 = vdwg.mxu0
        %531 = vset.pattern.permute.xlu0 0
        %532 = vperm.xlu0 %531, %v408
        %v533 = vpop.permute.xlu0 %532
        %v535 = vmul.f32 %v508, %v533
        %v536 = vmul.f32 %v528, %v533
        %538 = vset.pattern.permute.xlu0 0
        %539 = vperm.xlu0 %538, %v409
        %v540 = vpop.permute.xlu0 %539
        %v542 = vadd.f32 %v535, %v540
        %v543 = vadd.f32 %v536, %v540
        %v544 = vmax.f32 %v542, 0.0
        %v545 = vmax.f32 %v543, 0.0
        %v546 = vld [vmem:[%s5] sm:$0xff]
        %v547 = vld [vmem:[%s6] sm:$0xff]
        %v548 = vld [vmem:[%s7] sm:$0xff]
        %549 = vrot.lane.b32.xlu0 %v544, 17
        %v550 = vpop.permute.xlu0 %549
        %551 = vrot.lane.b32.xlu0 %v545, 17
        %v552 = vpop.permute.xlu0 %551
        %v553 = vsel %vm416, %v550, %v552
        %v554 = vsel %vm416, %v552, %v550
        %v555 = vsel %vm349, %v554, 0.0
        %v556 = vsel %vm350, %v553, 0.0
        %557 = vrot.lane.b32.xlu0 %v544, 16
        %v558 = vpop.permute.xlu0 %557
        %559 = vrot.lane.b32.xlu0 %v545, 16
        %v560 = vpop.permute.xlu0 %559
        %v561 = vsel %vm425, %v558, %v560
        %v562 = vsel %vm425, %v560, %v558
        %v563 = vsel %vm357, %v562, 0.0
        %v564 = vsel %vm358, %v561, 0.0
        %565 = vrot.lane.b32.xlu0 %v544, 15
        %v566 = vpop.permute.xlu0 %565
        %567 = vrot.lane.b32.xlu0 %v545, 15
        %v568 = vpop.permute.xlu0 %567
        %v569 = vsel %vm434, %v566, %v568
        %v570 = vsel %vm434, %v568, %v566
        %v571 = vsel %vm367, %v570, 0.0
        %v572 = vsel %vm368, %v569, 0.0
        %573 = vrot.lane.b32.xlu0 %v544, 1
        %v574 = vpop.permute.xlu0 %573
        %575 = vrot.lane.b32.xlu0 %v545, 1
        %v576 = vpop.permute.xlu0 %575
        %v577 = vsel %vm443, %v574, %v576
        %v578 = vsel %vm443, %v576, %v574
        %v579 = vsel %vm377, %v578, 0.0
        %v580 = vsel %vm378, %v577, 0.0
        %v581 = vsel %vm381, %v544, 0.0
        %v582 = vsel %vm382, %v545, 0.0
        %583 = vrot.lane.b32.xlu0 %v544, 127
        %v584 = vpop.permute.xlu0 %583
        %585 = vrot.lane.b32.xlu0 %v545, 127
        %v586 = vpop.permute.xlu0 %585
        %v587 = vsel %vm454, %v584, %v586
        %v588 = vsel %vm454, %v586, %v584
        %v589 = vsel %vm385, %v587, 0.0
        %v590 = vsel %vm386, %v588, 0.0
        %591 = vrot.lane.b32.xlu0 %v544, 113
        %v592 = vpop.permute.xlu0 %591
        %593 = vrot.lane.b32.xlu0 %v545, 113
        %v594 = vpop.permute.xlu0 %593
        %v595 = vsel %vm463, %v592, %v594
        %v596 = vsel %vm463, %v594, %v592
        %v597 = vsel %vm397, %v595, 0.0
        %v598 = vsel %vm398, %v596, 0.0
        %599 = vrot.lane.b32.xlu0 %v544, 112
        %v600 = vpop.permute.xlu0 %599
        %601 = vrot.lane.b32.xlu0 %v545, 112
        %v602 = vpop.permute.xlu0 %601
        %v603 = vsel %vm472, %v600, %v602
        %v604 = vsel %vm472, %v602, %v600
        %v605 = vsel %vm401, %v603, 0.0
        %v606 = vsel %vm402, %v604, 0.0
        %607 = vrot.lane.b32.xlu0 %v544, 111
        %v608 = vpop.permute.xlu0 %607
        %609 = vrot.lane.b32.xlu0 %v545, 111
        %v610 = vpop.permute.xlu0 %609
        %v611 = vsel %vm481, %v608, %v610
        %v612 = vsel %vm481, %v610, %v608
        %v613 = vsel %vm405, %v611, 0.0
        %v614 = vsel %vm406, %v612, 0.0
        %v616 = vsel %vm486, %v546, 0
        %618 = vmatpush.msra.mxu0 0.0
        %619 = vmatpush.msra.mxu0 0.0
        %620 = vmatpush.msra.mxu0 0.0
        %621 = vmatpush.msra.mxu0 0.0
        %622 = vmatpush.msra.mxu0 0.0
        %623 = vmatpush.msra.mxu0 0.0
        %624 = vmatpush.msra.mxu0 0.0
        %625 = vmatpush.msra.mxu0 %v613
        %626 = vmatpush.msra.mxu0 %v605
        %627 = vmatpush.msra.mxu0 %v597
        %628 = vmatpush.msra.mxu0 %v589
        %629 = vmatpush.msra.mxu0 %v581
        %630 = vmatpush.msra.mxu0 %v579
        %631 = vmatpush.msra.mxu0 %v571
        %632 = vmatpush.msra.mxu0 %v563
        %633 = vmatpush.msra.mxu0 %v555
        %634 = vmatmul.f32.gmra.mxu0 %v616
        %v635 = vpop.f32.mrf.mxu0
        %v636 = vadd.f32 0.0, %v635
        %637 = vdwg.mxu0
        %638 = vmatpush.msra.mxu0 0.0
        %639 = vmatpush.msra.mxu0 0.0
        %640 = vmatpush.msra.mxu0 0.0
        %641 = vmatpush.msra.mxu0 0.0
        %642 = vmatpush.msra.mxu0 0.0
        %643 = vmatpush.msra.mxu0 0.0
        %644 = vmatpush.msra.mxu0 0.0
        %645 = vmatpush.msra.mxu0 %v614
        %646 = vmatpush.msra.mxu0 %v606
        %647 = vmatpush.msra.mxu0 %v598
        %648 = vmatpush.msra.mxu0 %v590
        %649 = vmatpush.msra.mxu0 %v582
        %650 = vmatpush.msra.mxu0 %v580
        %651 = vmatpush.msra.mxu0 %v572
        %652 = vmatpush.msra.mxu0 %v564
        %653 = vmatpush.msra.mxu0 %v556
        %654 = vmatmul.f32.gmra.mxu0 %v616
        %v655 = vpop.f32.mrf.mxu0
        %v656 = vadd.f32 0.0, %v655
        %657 = vdwg.mxu0
        %659 = vset.pattern.permute.xlu0 0
        %660 = vperm.xlu0 %659, %v547
        %v661 = vpop.permute.xlu0 %660
        %v663 = vmul.f32 %v636, %v661
        %v664 = vmul.f32 %v656, %v661
        %666 = vset.pattern.permute.xlu0 0
        %667 = vperm.xlu0 %666, %v548
        %v668 = vpop.permute.xlu0 %667
        %v670 = vadd.f32 %v663, %v668
        %v671 = vadd.f32 %v664, %v668
        %v672 = vadd.f32 %v670, %v324
        %v673 = vadd.f32 %v671, %v325
        %v674 = vmax.f32 %v672, 0.0
        %v675 = vmax.f32 %v673, 0.0
        %676 = vst [vmem:[%s323] sm:$0xff] %v674
        %677 = vst [vmem:[%s323 + $0x8] sm:$0xff] %v675
        %s678 = sand.u32 %s206, 1
        %s679 = scalar_lea.sflag [#allocation4], %s678
        %s680 = sand.u32 %s206, 1
        %s681 = smul.addr %s680, 16
        %s682 = scalar_lea.vmem [#allocation5], %s681
        // Predicated region
        $region57: #{tpu_custom_call.1} parent=51 // pred_check
          %p683 = pneg %p216
        $region58: #{tpu_custom_call.1} parent=51 // pred_check_branch
          %685 = sbr.rel (%p683) target = $region60
        $region59: #{tpu_custom_call.1} parent=51 // pred_region
          %687 = vsyncadd %s679, 0
          %s688 = smul.addr %s25, 2
          %s689 = smul.addr %s688, 8
          %s690 = scalar_lea.hbm %s8, %s689
          %s692 = sshll.u32 %s682, 4
          %s693 = int_to_ptr.vmem [resolvable:$true] %s692
          %s694 = sshll.u32 %s690, 4
          %s695 = int_to_ptr.hbm [resolvable:$true] %s694
          %697 = dma.vmem_to_hbm [thread:$0]  %s693, 256, %s695, %s679
        $region60: #{tpu_custom_call.1} parent=51 // pred_fallthru
          _
      $region52: #{tpu_custom_call.1} parent=5 // pred_fallthru
        _
      %p698 = scmp.le.s32.totalorder 2, %s20
      // Predicated region
      $region61: #{tpu_custom_call.1} parent=5 // pred_check
        %p699 = pneg %p698
      $region62: #{tpu_custom_call.1} parent=5 // pred_check_branch
        %701 = sbr.rel (%p699) target = $region64
      $region63: #{tpu_custom_call.1} parent=5 // pred_region
        %s702 = ssub.s32 %s20, 2
        // Predicated region
        $region65: #{tpu_custom_call.1} parent=63 // pred_check
          %p703 = pneg %p222
        $region66: #{tpu_custom_call.1} parent=63 // pred_check_branch
          %705 = sbr.rel (%p703) target = $region68
        $region67: #{tpu_custom_call.1} parent=63 // pred_region
          %s706 = sand.u32 %s207, 1
          %s707 = scalar_lea.sflag [#allocation4], %s706
          %s708 = sand.u32 %s207, 1
          %s709 = smul.addr %s708, 16
          %s710 = scalar_lea.vmem [#allocation5], %s709
          %712 = dma.done %s707, 256
        $region68: #{tpu_custom_call.1} parent=63 // pred_fallthru
          _
      $region64: #{tpu_custom_call.1} parent=5 // pred_fallthru
        _
    $region6: #{tpu_custom_call.1} parent=1 // loop_footer
      %s24 = sadd.s32 1, %s20
    $region7: #{tpu_custom_call.1} parent=1 // loop_footer_branch
      %19 = sbr.rel target = $region3
    $region8: #{tpu_custom_call.1} parent=1 // loop_exit
      _
    %713 = vsyncpa [#allocation3], 1
    %s714 = scalar_lea.sflag [#allocation3], 1
    %715 = vsyncpa %s714, 1
    %716 = vsyncpa [#allocation4], 1
    %s717 = scalar_lea.sflag [#allocation4], 1
    %718 = vsyncpa %s717, 1

</llo_original>
